<compile_context>
chip_gen: v5e
topology: v5e:2x2
jax: 0.10.0
libtpu: 0.0.40
codegen_flags: <defaults>
</compile_context>

<pallas_src>
import jax
import jax.numpy as jnp
from jax.experimental import pallas as pl
from jax.experimental.pallas import tpu as pltpu


def _round_up(n: int, m: int) -> int:
    return ((n + m - 1) // m) * m


def _mlp_kernel(x_ref, w1_ref, b1_ref, w2_ref, b2_ref, o_ref):
    # x_ref: (TB, 8)   w1_ref: (8, 64)  b1_ref: (1, 64)
    # w2_ref: (64, 4)  b2_ref: (1, 4)   o_ref: (TB, 4)
    # Weights/biases are VMEM-resident (constant index maps); only x and o stream.
    x = x_ref[...].astype(jnp.float32)
    w1 = w1_ref[...].astype(jnp.float32)
    w2 = w2_ref[...].astype(jnp.float32)
    h = jnp.tanh(jnp.dot(x, w1, preferred_element_type=jnp.float32) + b1_ref[...])
    y = jnp.dot(h, w2, preferred_element_type=jnp.float32) + b2_ref[...]
    o_ref[...] = y.astype(o_ref.dtype)


def prepare_params(w1, b1, w2, b2, *, dtype=jnp.float32):
    """One-time layout prep: torch (out,in) -> kernel (in,out); biases as rows.

    Pass dtype=jnp.bfloat16 (and feed bf16 x) to halve the streamed HBM bytes;
    accumulation inside the kernel stays f32.
    """
    w1_t = w1.T.astype(dtype)                      # (8, 64)
    b1_r = b1.reshape(1, 64).astype(jnp.float32)   # (1, 64)
    w2_t = w2.T.astype(dtype)                      # (64, 4)
    b2_r = b2.reshape(1, 4).astype(jnp.float32)    # (1, 4)
    return w1_t, b1_r, w2_t, b2_r


def simple_policy_gradient_forward(x, params, *, block_b: int = 8192):
    """Forward pass of SimplePolicyGradient.

    x:      (B, 8) float32 or bfloat16
    params: output of prepare_params(...)
    returns (B, 4) float32 logits
    """
    w1_t, b1_r, w2_t, b2_r = params
    B = x.shape[0]

    # Batch tile: multiple of the sublane count (16 covers bf16 packing too).
    row_align = 16 if x.dtype == jnp.bfloat16 else 8
    Bp_min = _round_up(max(B, 1), row_align)
    tb = _round_up(min(block_b, Bp_min), row_align)
    # v7x has 2 TensorCores fed by sharding grid steps: keep >= 2 steps for
    # big batches (no-op for the single-TC v5e/v6e and for tiny batches).
    if Bp_min >= 256 and Bp_min <= tb:
        tb = _round_up((Bp_min + 1) // 2, row_align)

    Bp = _round_up(B, tb)
    if Bp != B:
        x = jnp.pad(x, ((0, Bp - B), (0, 0)))

    grid = (Bp // tb,)

    out = pl.pallas_call(
        _mlp_kernel,
        out_shape=jax.ShapeDtypeStruct((Bp, 4), jnp.float32),
        grid=grid,
        in_specs=[
            # x: streamed per grid step (double-buffered by BlockSpec).
            pl.BlockSpec((tb, 8), lambda i: (i, 0)),
            # weights/biases: constant index map -> DMA'd once, VMEM-resident.
            pl.BlockSpec((8, 64), lambda i: (0, 0)),
            pl.BlockSpec((1, 64), lambda i: (0, 0)),
            pl.BlockSpec((64, 4), lambda i: (0, 0)),
            pl.BlockSpec((1, 4), lambda i: (0, 0)),
        ],
        # Un-padded (TB, 4) output block: last dim equals the full array dim.
        out_specs=pl.BlockSpec((tb, 4), lambda i: (i, 0)),
        compiler_params=pltpu.CompilerParams(
            # batch axis is fully independent -> shard across TCs on v7x.
            dimension_semantics=("parallel",),
        ),
    )(x, w1_t, b1_r, w2_t, b2_r)

    return out[:B]


def init_params(key):
    # Deterministic init mirroring nn.Linear default: U(-1/sqrt(fan_in), ...).
    k1, k2, k3, k4 = jax.random.split(key, 4)
    bound1 = 1.0 / jnp.sqrt(8.0)
    bound2 = 1.0 / jnp.sqrt(64.0)
    w1 = jax.random.uniform(k1, (64, 8), jnp.float32, -bound1, bound1)  # (out, in)
    b1 = jax.random.uniform(k2, (64,), jnp.float32, -bound1, bound1)
    w2 = jax.random.uniform(k3, (4, 64), jnp.float32, -bound2, bound2)
    b2 = jax.random.uniform(k4, (4,), jnp.float32, -bound2, bound2)
    return w1, b1, w2, b2


def _reference(x, w1, b1, w2, b2):
    return jnp.tanh(x @ w1.T + b1) @ w2.T + b2


if __name__ == "__main__":
    key = jax.random.PRNGKey(0)
    kx, kx2, kp = jax.random.split(key, 3)
    w1, b1, w2, b2 = init_params(kp)

    # Prep kernel-ready weight layout once (outside the per-call path).
    params = prepare_params(w1, b1, w2, b2)
    fwd = jax.jit(simple_policy_gradient_forward, static_argnames=("block_b",))

    # Small demo batch (LunarLander obs dim = 8): single grid step.
    batch = 8
    x = jax.random.normal(kx, (batch, 8), jnp.float32)
    out = jax.block_until_ready(fwd(x, params))
    assert out.shape == (batch, 4)
    assert jnp.allclose(out, _reference(x, w1, b1, w2, b2), atol=1e-5), \
        "mismatch vs reference (small batch)"

    # Rollout-sized, uneven batch: exercises batch tiling + padding path.
    big_batch = 1000
    xb = jax.random.normal(kx2, (big_batch, 8), jnp.float32)
    out_b = jax.block_until_ready(fwd(xb, params, block_b=256))
    assert out_b.shape == (big_batch, 4)
    assert jnp.allclose(out_b, _reference(xb, w1, b1, w2, b2), atol=1e-5), \
        "mismatch vs reference (tiled batch)"

    # Optional bf16 x/weight stream (halves dominant HBM read); looser tolerance.
    params_bf16 = prepare_params(w1, b1, w2, b2, dtype=jnp.bfloat16)
    out_bf = jax.block_until_ready(
        fwd(xb.astype(jnp.bfloat16), params_bf16, block_b=256)
    )
    assert out_bf.shape == (big_batch, 4)
    assert jnp.allclose(out_bf, _reference(xb, w1, b1, w2, b2), atol=5e-2), \
        "mismatch vs reference (bf16 stream)"

    print("KERNEL_OK")
</pallas_src>

<mosaic_0001>
module attributes {stable_mosaic.version = 11 : i64} {
  func.func @_mlp_kernel(%arg0: i32, %arg1: memref<8x8xf32, #tpu.memory_space<vmem>>, %arg2: memref<8x64xf32, #tpu.memory_space<vmem>>, %arg3: memref<1x64xf32, #tpu.memory_space<vmem>>, %arg4: memref<64x4xf32, #tpu.memory_space<vmem>>, %arg5: memref<1x4xf32, #tpu.memory_space<vmem>>, %arg6: memref<8x4xf32, #tpu.memory_space<vmem>>) attributes {dimension_semantics = [#tpu.dimension_semantics<parallel>], iteration_bounds = array<i64: 1>, scalar_prefetch = 0 : i64, scratch_operands = 0 : i64, tpu.core_type = #tpu.core_type<tc>, window_params = [{transform_indices = @transform_0, window_bounds = array<i64: 8, 8>}, {pipeline_mode = #tpu.pipeline_mode<synchronous>, transform_indices = @transform_1, window_bounds = array<i64: 8, 64>}, {pipeline_mode = #tpu.pipeline_mode<synchronous>, transform_indices = @transform_2, window_bounds = array<i64: 1, 64>}, {pipeline_mode = #tpu.pipeline_mode<synchronous>, transform_indices = @transform_3, window_bounds = array<i64: 64, 4>}, {pipeline_mode = #tpu.pipeline_mode<synchronous>, transform_indices = @transform_4, window_bounds = array<i64: 1, 4>}, {transform_indices = @transform_5, window_bounds = array<i64: 8, 4>}]} {
    %c0 = arith.constant 0 : index
    %c0_0 = arith.constant 0 : index
    %0 = vector.load %arg1[%c0, %c0_0] : memref<8x8xf32, #tpu.memory_space<vmem>>, vector<8x8xf32>
    %c0_1 = arith.constant 0 : index
    %c0_2 = arith.constant 0 : index
    %1 = vector.load %arg2[%c0_1, %c0_2] : memref<8x64xf32, #tpu.memory_space<vmem>>, vector<8x64xf32>
    %c0_3 = arith.constant 0 : index
    %c0_4 = arith.constant 0 : index
    %2 = vector.load %arg4[%c0_3, %c0_4] : memref<64x4xf32, #tpu.memory_space<vmem>>, vector<64x4xf32>
    %cst = arith.constant dense<0.000000e+00> : vector<8x64xf32>
    %3 = tpu.matmul %0, %1, %cst {dimension_numbers = #tpu.dot_dimension_numbers<[1], [0], [0], [1], [0, 0, 1, 1], [], []>} : vector<8x8xf32>, vector<8x64xf32>, vector<8x64xf32> -> vector<8x64xf32>
    %c0_5 = arith.constant 0 : index
    %c0_6 = arith.constant 0 : index
    %4 = vector.load %arg3[%c0_5, %c0_6] : memref<1x64xf32, #tpu.memory_space<vmem>>, vector<1x64xf32>
    %5 = vector.broadcast %4 : vector<1x64xf32> to vector<8x64xf32>
    %6 = arith.addf %3, %5 : vector<8x64xf32>
    %7 = math.tanh %6 : vector<8x64xf32>
    %cst_7 = arith.constant dense<0.000000e+00> : vector<8x4xf32>
    %8 = tpu.matmul %7, %2, %cst_7 {dimension_numbers = #tpu.dot_dimension_numbers<[1], [0], [0], [1], [0, 0, 1, 1], [], []>} : vector<8x64xf32>, vector<64x4xf32>, vector<8x4xf32> -> vector<8x4xf32>
    %c0_8 = arith.constant 0 : index
    %c0_9 = arith.constant 0 : index
    %9 = vector.load %arg5[%c0_8, %c0_9] : memref<1x4xf32, #tpu.memory_space<vmem>>, vector<1x4xf32>
    %10 = vector.broadcast %9 : vector<1x4xf32> to vector<8x4xf32>
    %11 = arith.addf %8, %10 : vector<8x4xf32>
    %c0_10 = arith.constant 0 : index
    %c0_11 = arith.constant 0 : index
    %12 = vector.load %arg6[%c0_10, %c0_11] : memref<8x4xf32, #tpu.memory_space<vmem>>, vector<8x4xf32>
    tpu.vector_store %arg6[%c0_10, %c0_11], %11 {strides = array<i32>} : memref<8x4xf32, #tpu.memory_space<vmem>>, vector<8x4xf32>,
    return
  }
  func.func @transform_0(%arg0: i32) -> (i32, i32) {
    %c0_i32 = arith.constant 0 : i32
    %c0_i32_0 = arith.constant 0 : i32
    return %arg0, %c0_i32 : i32, i32
  }
  func.func @transform_1(%arg0: i32) -> (i32, i32) {
    %c0_i32 = arith.constant 0 : i32
    %c0_i32_0 = arith.constant 0 : i32
    %c0_i32_1 = arith.constant 0 : i32
    return %c0_i32, %c0_i32_0 : i32, i32
  }
  func.func @transform_2(%arg0: i32) -> (i32, i32) {
    %c0_i32 = arith.constant 0 : i32
    %c0_i32_0 = arith.constant 0 : i32
    %c0_i32_1 = arith.constant 0 : i32
    return %c0_i32, %c0_i32_0 : i32, i32
  }
  func.func @transform_3(%arg0: i32) -> (i32, i32) {
    %c0_i32 = arith.constant 0 : i32
    %c0_i32_0 = arith.constant 0 : i32
    %c0_i32_1 = arith.constant 0 : i32
    return %c0_i32, %c0_i32_0 : i32, i32
  }
  func.func @transform_4(%arg0: i32) -> (i32, i32) {
    %c0_i32 = arith.constant 0 : i32
    %c0_i32_0 = arith.constant 0 : i32
    %c0_i32_1 = arith.constant 0 : i32
    return %c0_i32, %c0_i32_0 : i32, i32
  }
  func.func @transform_5(%arg0: i32) -> (i32, i32) {
    %c0_i32 = arith.constant 0 : i32
    %c0_i32_0 = arith.constant 0 : i32
    return %arg0, %c0_i32 : i32, i32
  }
}

</mosaic_0001>

<llo_original>
// kernel: simple_policy_gradient_forward.1
$region0: #{simple_policy_gradient_forward.1}
  #allocation0 [shape = 'u32[]', space=smem, size = 0x4, offset = 0x4, fixed_abs, tag = 'smem constant byte address 0x4 - core index']
  #allocation1 [shape = 'u32[72,128]{1,0:T(1,128)}', space=vmem, size = 0x9000, scoped, tag = 'internal scratch']
  %s0 = inlined_call_operand.vmem [shape: f32[8,8], index: 0, kind: input, shape index: {}]
  %s1 = inlined_call_operand.vmem [shape: f32[8,64], index: 1, kind: input, shape index: {}]
  %s2 = inlined_call_operand.vmem [shape: f32[1,64], index: 2, kind: input, shape index: {}]
  %s3 = inlined_call_operand.vmem [shape: f32[64,4], index: 3, kind: input, shape index: {}]
  %s4 = inlined_call_operand.vmem [shape: f32[1,4], index: 4, kind: input, shape index: {}]
  %s5 = inlined_call_operand.vmem [shape: f32[8,4], index: 5, kind: output, shape index: {}]
  %s6 = sld [smem:[#allocation0]]
  $region30: #{simple_policy_gradient_forward.1} parent=0
    _
  %s8 = ssub.s32 1, %s6
  %s9 = scalar_select 0, %s8, %s6
  // Predicated region
  $region2: #{simple_policy_gradient_forward.1} parent=0 // pred_check
    _
  $region3: #{simple_policy_gradient_forward.1} parent=0 // pred_check_branch
    %11 = sbr.rel (0) target = $region5
  $region4: #{simple_policy_gradient_forward.1} parent=0 // pred_region
    _
  $region5: #{simple_policy_gradient_forward.1} parent=0 // pred_fallthru
    _
  // Predicated region
  $region6: #{simple_policy_gradient_forward.1} parent=0 // pred_check
    _
  $region7: #{simple_policy_gradient_forward.1} parent=0 // pred_check_branch
    %13 = sbr.rel (0) target = $region9
  $region8: #{simple_policy_gradient_forward.1} parent=0 // pred_region
    _
  $region9: #{simple_policy_gradient_forward.1} parent=0 // pred_fallthru
    _
  // Predicated region
  $region10: #{simple_policy_gradient_forward.1} parent=0 // pred_check
    _
  $region11: #{simple_policy_gradient_forward.1} parent=0 // pred_check_branch
    %15 = sbr.rel (0) target = $region13
  $region12: #{simple_policy_gradient_forward.1} parent=0 // pred_region
    _
  $region13: #{simple_policy_gradient_forward.1} parent=0 // pred_fallthru
    _
  // Predicated region
  $region14: #{simple_policy_gradient_forward.1} parent=0 // pred_check
    _
  $region15: #{simple_policy_gradient_forward.1} parent=0 // pred_check_branch
    %17 = sbr.rel (0) target = $region17
  $region16: #{simple_policy_gradient_forward.1} parent=0 // pred_region
    _
  $region17: #{simple_policy_gradient_forward.1} parent=0 // pred_fallthru
    _
  // Predicated region
  $region18: #{simple_policy_gradient_forward.1} parent=0 // pred_check
    _
  $region19: #{simple_policy_gradient_forward.1} parent=0 // pred_check_branch
    %19 = sbr.rel (0) target = $region21
  $region20: #{simple_policy_gradient_forward.1} parent=0 // pred_region
    _
  $region21: #{simple_policy_gradient_forward.1} parent=0 // pred_fallthru
    _
  %v20 = vld [vmem:[%s0] sm:$0xff]
  %v21 = vld [vmem:[%s1] sm:$0xff]
  %v22 = vld [vmem:[%s3] sm:$0xff]
  %v23 = vld [vmem:[%s3 + $0x8] sm:$0xff]
  %v24 = vld [vmem:[%s3 + $0x10] sm:$0xff]
  %v25 = vld [vmem:[%s3 + $0x18] sm:$0xff]
  %v26 = vld [vmem:[%s3 + $0x20] sm:$0xff]
  %v27 = vld [vmem:[%s3 + $0x28] sm:$0xff]
  %v28 = vld [vmem:[%s3 + $0x30] sm:$0xff]
  %v29 = vld [vmem:[%s3 + $0x38] sm:$0xff]
  %v30 = vld [vmem:[%s2] sm:$0x1]
  %v32 = vperm.slane %v30, 0
  %vm34 = vcmask 64512
  %v36 = vsel %vm34, %v20, 0
  %38 = vmatpush.msra.mxu0 0.0
  %39 = vmatpush.msra.mxu0 0.0
  %40 = vmatpush.msra.mxu0 0.0
  %41 = vmatpush.msra.mxu0 0.0
  %42 = vmatpush.msra.mxu0 0.0
  %43 = vmatpush.msra.mxu0 0.0
  %44 = vmatpush.msra.mxu0 0.0
  %45 = vmatpush.msra.mxu0 0.0
  %46 = vmatpush.msra.mxu0 0.0
  %47 = vmatpush.msra.mxu0 0.0
  %48 = vmatpush.msra.mxu0 0.0
  %49 = vmatpush.msra.mxu0 0.0
  %50 = vmatpush.msra.mxu0 0.0
  %51 = vmatpush.msra.mxu0 0.0
  %52 = vmatpush.msra.mxu0 0.0
  %53 = vmatpush.msra.mxu0 %v21
  %54 = vmatmul.f32.gmra.mxu0 %v36
  %v55 = vpop.f32.mrf.mxu0
  %v56 = vadd.f32 %v32, %v55
  %57 = vdwg.mxu0
  %v58 = vtanh.pop %v56
  %v59 = vld [vmem:[%s4] sm:$0x1]
  %v61 = vperm.slane %v59, 0
  %vm63 = vcmask 523264
  %v65 = vsel %vm63, %v58, 0
  %67 = vmatpush.msra.mxu0 0.0
  %68 = vmatpush.msra.mxu0 0.0
  %69 = vmatpush.msra.mxu0 0.0
  %70 = vmatpush.msra.mxu0 0.0
  %71 = vmatpush.msra.mxu0 0.0
  %72 = vmatpush.msra.mxu0 0.0
  %73 = vmatpush.msra.mxu0 0.0
  %74 = vmatpush.msra.mxu0 0.0
  %75 = vmatpush.msra.mxu0 %v29
  %76 = vmatpush.msra.mxu0 %v28
  %77 = vmatpush.msra.mxu0 %v27
  %78 = vmatpush.msra.mxu0 %v26
  %79 = vmatpush.msra.mxu0 %v25
  %80 = vmatpush.msra.mxu0 %v24
  %81 = vmatpush.msra.mxu0 %v23
  %82 = vmatpush.msra.mxu0 %v22
  %83 = vmatmul.f32.gmra.mxu0 %v65
  %v84 = vpop.f32.mrf.mxu0
  %v85 = vadd.f32 %v61, %v84
  %86 = vdwg.mxu0
  %vm87 = vcmask 31744
  %88 = vst.msk [vmem:[%s5] sm:$0xff] %vm87, %v85
  // Predicated region
  $region22: #{simple_policy_gradient_forward.1} parent=0 // pred_check
    _
  $region23: #{simple_policy_gradient_forward.1} parent=0 // pred_check_branch
    %90 = sbr.rel (0) target = $region25
  $region24: #{simple_policy_gradient_forward.1} parent=0 // pred_region
    _
  $region25: #{simple_policy_gradient_forward.1} parent=0 // pred_fallthru
    _
  // Predicated region
  $region26: #{simple_policy_gradient_forward.1} parent=0 // pred_check
    _
  $region27: #{simple_policy_gradient_forward.1} parent=0 // pred_check_branch
    %92 = sbr.rel (0) target = $region29
  $region28: #{simple_policy_gradient_forward.1} parent=0 // pred_region
    _
  $region29: #{simple_policy_gradient_forward.1} parent=0 // pred_fallthru
    _

</llo_original>
